<compile_context>
chip_gen: v5e
topology: v5e:2x2
jax: 0.10.0
libtpu: 0.0.40
codegen_flags: <defaults>
</compile_context>

<pallas_src>
import jax
import jax.numpy as jnp
from jax.experimental import pallas as pl
from jax.experimental.pallas import tpu as pltpu

NEG_SLOPE = 0.01        # nn.LeakyReLU default negative_slope
LANES = 128             # TPU lane width (batch tile granularity)
MAX_TILE_B = 4096       # batch-tile cap (multiple of 128; ~1.5 MiB of VMEM)


def _detect_tensorcores(default=1):
    """Best-effort TensorCores-per-chip (2 on v7x, 1 on v5e/v6e)."""
    try:
        info = pltpu.get_tpu_info()
    except Exception:
        return default
    for name in ("num_cores", "core_count", "num_tensorcores",
                 "tensorcore_count", "cores_per_chip", "num_cores_per_chip"):
        v = getattr(info, name, None)
        if isinstance(v, int) and 1 <= v <= 16:
            return v
    return default


def _choose_tile(B, num_cores):
    """Batch tile (lane axis): multiple of 128, as large as possible, split into
    >= num_cores tiles (when the batch is big enough) so every TensorCore of a
    2-TC chip (v7x) gets work via dimension_semantics=("parallel",).  Single-TC
    chips (v5e/v6e) get grid=1 whenever B <= MAX_TILE_B."""
    n_chunks = max(1, pl.cdiv(B, LANES))                      # 128-wide chunks
    n_tiles = max(min(num_cores, n_chunks),
                  pl.cdiv(n_chunks * LANES, MAX_TILE_B))
    tile = pl.cdiv(n_chunks, n_tiles) * LANES
    return min(tile, MAX_TILE_B)


def _make_kernel(Din, H1, H2, NC):
    r2 = H1            # row offset of layer-2 params (multiple of 8)
    r3 = H1 + H2       # row offset of layer-3 params (multiple of 8)

    def kernel(x_ref, p_ref, pred_ref, feat_ref):
        p = p_ref[...]                                   # (H1+H2+NC, PC) f32
        w1 = p[0:H1, 0:Din]                              # (16, 5)
        b1 = p[0:H1, Din:Din + 1]                        # (16, 1)
        w2 = p[r2:r2 + H2, 0:H1]                         # (8, 16)
        b2 = p[r2:r2 + H2, H1:H1 + 1]                    # (8, 1)
        w3 = p[r3:r3 + NC, 0:H2]                         # (NC, 8)
        b3 = p[r3:r3 + NC, H2:H2 + 1]                    # (NC, 1)

        x = x_ref[...]                                   # (Din, TILE_B)

        # fuse_1: Linear(5,16) + LeakyReLU (feature-major: h = W x + b)
        z1 = jnp.dot(w1, x, preferred_element_type=jnp.float32) + b1
        h1 = jnp.maximum(z1, NEG_SLOPE * z1)             # (H1, TILE_B)

        # fuse_2: Linear(16,8) + LeakyReLU
        z2 = jnp.dot(w2, h1, preferred_element_type=jnp.float32) + b2
        h2 = jnp.maximum(z2, NEG_SLOPE * z2)             # (H2, TILE_B)

        # feature = feature / (||feature||_2 + 1e-9)  (norm over features=axis 0,
        # eps OUTSIDE the sqrt; exact reciprocal on the EUP, then multiply)
        nrm = jnp.sqrt(jnp.sum(h2 * h2, axis=0, keepdims=True))   # (1, TILE_B)
        inv = pl.reciprocal(nrm + 1e-9)                  # approx=False (exact)
        feat = h2 * inv                                  # (H2, TILE_B)

        # fc_pred: Linear(8, num_classes)
        pred = jnp.dot(w3, feat, preferred_element_type=jnp.float32) + b3

        # Two lane-dense slabs, each a single full-block (unmasked-lane) store.
        pred_ref[...] = pred.astype(pred_ref.dtype)      # (NC, TILE_B)
        feat_ref[...] = feat.astype(feat_ref.dtype)      # (H2, TILE_B)

    return kernel


def dvb_branch_forward(x, w1, b1, w2, b2, w3, b3, *, num_cores=None):
    """x: (B, 5) f32; Linear weights stored as (in_features, out_features)
    (transposed vs. torch), biases as (1, out_features).
    Returns (pred (B, num_classes), feat (B, 8))."""
    B, Din = x.shape
    H1, H2, NC = w1.shape[1], w2.shape[1], w3.shape[1]
    assert Din == w1.shape[0] and H1 == w2.shape[0] and H2 == w3.shape[0]

    if num_cores is None:
        num_cores = _detect_tensorcores()

    tile = _choose_tile(B, num_cores)
    grid = pl.cdiv(B, tile)
    Bp = grid * tile

    # Feature-major input (Din, Bp): batch on the 128-lane axis.  Padded batch
    # columns are zeros and are sliced away below (eps keeps their norm finite).
    x_fm = jnp.pad(x, ((0, Bp - B), (0, 0))).T.astype(jnp.float32)

    # Coalesce the six tiny parameters (~1 KiB total) into ONE grid-invariant
    # resident slab: a single input pipeline instead of six.
    PC = max(Din, H1, H2) + 1                 # weights + trailing bias column
    PR = H1 + H2 + NC
    params = jnp.zeros((PR, PC), jnp.float32)
    params = params.at[0:H1, 0:Din].set(w1.T)
    params = params.at[0:H1, Din].set(b1.reshape(-1))
    params = params.at[H1:H1 + H2, 0:H1].set(w2.T)
    params = params.at[H1:H1 + H2, H1].set(b2.reshape(-1))
    params = params.at[H1 + H2:PR, 0:H2].set(w3.T)
    params = params.at[H1 + H2:PR, H2].set(b3.reshape(-1))

    # Advisory cost: tiny, HBM/overhead-bound custom call.
    flops = 2 * Bp * (Din * H1 + H1 * H2 + H2 * NC)
    bytes_accessed = 4 * (Bp * (Din + H2 + NC) + PR * PC)
    cost = pl.CostEstimate(flops=flops, transcendentals=2 * Bp,
                           bytes_accessed=bytes_accessed)

    # Scoped-VMEM budget computed from the actual buffers (double-buffered x and
    # output tiles + intermediates + params) with 2x headroom, clamped to 32 MiB
    # so it never starves surrounding fusions (v7x has only 64 MiB VMEM per TC).
    per_tile = 4 * tile * (2 * Din + 2 * (NC + H2) + 2 * H1 + 3 * H2 + NC + 2)
    vmem_limit = int(min(max(2 * per_tile + (1 << 20), 4 << 20), 32 << 20))

    kernel = _make_kernel(Din, H1, H2, NC)
    pred_fm, feat_fm = pl.pallas_call(
        kernel,
        out_shape=(jax.ShapeDtypeStruct((NC, Bp), jnp.float32),
                   jax.ShapeDtypeStruct((H2, Bp), jnp.float32)),
        grid=(grid,),
        in_specs=[
            pl.BlockSpec((Din, tile), lambda i: (0, i)),   # x tile (feature-major)
            pl.BlockSpec((PR, PC), lambda i: (0, 0)),      # packed params (resident)
        ],
        out_specs=(
            pl.BlockSpec((NC, tile), lambda i: (0, i)),    # pred slab
            pl.BlockSpec((H2, tile), lambda i: (0, i)),    # feat slab
        ),
        compiler_params=pltpu.CompilerParams(
            dimension_semantics=("parallel",),
            vmem_limit_bytes=vmem_limit,
        ),
        cost_estimate=cost,
    )(x_fm, params)

    # Layout plumbing back to PyTorch-shaped outputs.
    pred = pred_fm[:, :B].T
    feat = feat_fm[:, :B].T
    return pred, feat


def _init_linear(key, fan_in, fan_out):
    """PyTorch nn.Linear default init: U(-1/sqrt(fan_in), +1/sqrt(fan_in)).
    Weight returned as (fan_in, fan_out) (transposed vs. torch), bias (1, fan_out)."""
    kw, kb = jax.random.split(key)
    bound = 1.0 / jnp.sqrt(fan_in)
    w = jax.random.uniform(kw, (fan_in, fan_out), jnp.float32, -bound, bound)
    b = jax.random.uniform(kb, (1, fan_out), jnp.float32, -bound, bound)
    return w, b


def _reference(x, w1, b1, w2, b2, w3, b3):
    h1 = jax.nn.leaky_relu(x @ w1 + b1, NEG_SLOPE)
    h2 = jax.nn.leaky_relu(h1 @ w2 + b2, NEG_SLOPE)
    feat = h2 / (jnp.linalg.norm(h2, axis=1, keepdims=True) + 1e-9)
    pred = feat @ w3 + b3
    return pred, feat


if __name__ == "__main__":
    num_classes = 4
    B = 16

    root = jax.random.PRNGKey(0)
    kx, k1, k2, k3 = jax.random.split(root, 4)

    x = jax.random.normal(kx, (B, 5), jnp.float32)
    w1, b1 = _init_linear(k1, 5, 16)           # fuse_1.fc
    w2, b2 = _init_linear(k2, 16, 8)           # fuse_2.fc
    w3, b3 = _init_linear(k3, 8, num_classes)  # fc_pred

    pred, feat = dvb_branch_forward(x, w1, b1, w2, b2, w3, b3)
    jax.block_until_ready((pred, feat))

    ref_pred, ref_feat = _reference(x, w1, b1, w2, b2, w3, b3)
    assert pred.shape == (B, num_classes) and feat.shape == (B, 8)
    assert jnp.allclose(pred, ref_pred, atol=1e-5, rtol=1e-5)
    assert jnp.allclose(feat, ref_feat, atol=1e-5, rtol=1e-5)

    print("KERNEL_OK")
</pallas_src>

<mosaic_0001>
module attributes {stable_mosaic.version = 11 : i64} {
  func.func @kernel(%arg0: i32, %arg1: memref<5x128xf32, #tpu.memory_space<vmem>>, %arg2: memref<28x17xf32, #tpu.memory_space<vmem>>, %arg3: memref<4x128xf32, #tpu.memory_space<vmem>>, %arg4: memref<8x128xf32, #tpu.memory_space<vmem>>) attributes {dimension_semantics = [#tpu.dimension_semantics<parallel>], iteration_bounds = array<i64: 1>, scalar_prefetch = 0 : i64, scratch_operands = 0 : i64, tpu.core_type = #tpu.core_type<tc>, window_params = [{transform_indices = @transform_0, window_bounds = array<i64: 5, 128>}, {pipeline_mode = #tpu.pipeline_mode<synchronous>, transform_indices = @transform_1, window_bounds = array<i64: 28, 17>}, {transform_indices = @transform_2, window_bounds = array<i64: 4, 128>}, {transform_indices = @transform_3, window_bounds = array<i64: 8, 128>}]} {
    %c0 = arith.constant 0 : index
    %c0_0 = arith.constant 0 : index
    %0 = vector.load %arg2[%c0, %c0_0] : memref<28x17xf32, #tpu.memory_space<vmem>>, vector<28x17xf32>
    %1 = vector.extract_strided_slice %0 {offsets = [0, 0], sizes = [16, 5], strides = [1, 1]} : vector<28x17xf32> to vector<16x5xf32>
    %2 = vector.extract_strided_slice %0 {offsets = [0, 5], sizes = [16, 1], strides = [1, 1]} : vector<28x17xf32> to vector<16x1xf32>
    %3 = vector.extract_strided_slice %0 {offsets = [16, 0], sizes = [8, 16], strides = [1, 1]} : vector<28x17xf32> to vector<8x16xf32>
    %4 = vector.extract_strided_slice %0 {offsets = [16, 16], sizes = [8, 1], strides = [1, 1]} : vector<28x17xf32> to vector<8x1xf32>
    %5 = vector.extract_strided_slice %0 {offsets = [24, 0], sizes = [4, 8], strides = [1, 1]} : vector<28x17xf32> to vector<4x8xf32>
    %6 = vector.extract_strided_slice %0 {offsets = [24, 8], sizes = [4, 1], strides = [1, 1]} : vector<28x17xf32> to vector<4x1xf32>
    %c0_1 = arith.constant 0 : index
    %c0_2 = arith.constant 0 : index
    %7 = vector.load %arg1[%c0_1, %c0_2] : memref<5x128xf32, #tpu.memory_space<vmem>>, vector<5x128xf32>
    %cst = arith.constant dense<0.000000e+00> : vector<16x128xf32>
    %8 = tpu.matmul %1, %7, %cst {dimension_numbers = #tpu.dot_dimension_numbers<[1], [0], [0], [1], [0, 0, 1, 1], [], []>} : vector<16x5xf32>, vector<5x128xf32>, vector<16x128xf32> -> vector<16x128xf32>
    %9 = vector.broadcast %2 : vector<16x1xf32> to vector<16x128xf32>
    %10 = arith.addf %8, %9 : vector<16x128xf32>
    %cst_3 = arith.constant 0.00999999977 : f32
    %11 = vector.broadcast %cst_3 : f32 to vector<16x128xf32>
    %12 = arith.mulf %11, %10 : vector<16x128xf32>
    %13 = arith.maximumf %10, %12 : vector<16x128xf32>
    %cst_4 = arith.constant dense<0.000000e+00> : vector<8x128xf32>
    %14 = tpu.matmul %3, %13, %cst_4 {dimension_numbers = #tpu.dot_dimension_numbers<[1], [0], [0], [1], [0, 0, 1, 1], [], []>} : vector<8x16xf32>, vector<16x128xf32>, vector<8x128xf32> -> vector<8x128xf32>
    %15 = vector.broadcast %4 : vector<8x1xf32> to vector<8x128xf32>
    %16 = arith.addf %14, %15 : vector<8x128xf32>
    %cst_5 = arith.constant 0.00999999977 : f32
    %17 = vector.broadcast %cst_5 : f32 to vector<8x128xf32>
    %18 = arith.mulf %17, %16 : vector<8x128xf32>
    %19 = arith.maximumf %16, %18 : vector<8x128xf32>
    %20 = arith.mulf %19, %19 : vector<8x128xf32>
    %cst_6 = arith.constant dense<0.000000e+00> : vector<128xf32>
    %21 = vector.multi_reduction <add>, %20, %cst_6 [0] : vector<8x128xf32> to vector<128xf32>
    %22 = vector.shape_cast %21 : vector<128xf32> to vector<1x128xf32>
    %23 = math.sqrt %22 : vector<1x128xf32>
    %cst_7 = arith.constant 9.99999971E-10 : f32
    %24 = vector.broadcast %cst_7 : f32 to vector<1x128xf32>
    %25 = arith.addf %23, %24 : vector<1x128xf32>
    %26 = tpu.reciprocal %25 : vector<1x128xf32> -> vector<1x128xf32>
    %27 = vector.broadcast %26 : vector<1x128xf32> to vector<8x128xf32>
    %28 = arith.mulf %19, %27 : vector<8x128xf32>
    %cst_8 = arith.constant dense<0.000000e+00> : vector<4x128xf32>
    %29 = tpu.matmul %5, %28, %cst_8 {dimension_numbers = #tpu.dot_dimension_numbers<[1], [0], [0], [1], [0, 0, 1, 1], [], []>} : vector<4x8xf32>, vector<8x128xf32>, vector<4x128xf32> -> vector<4x128xf32>
    %30 = vector.broadcast %6 : vector<4x1xf32> to vector<4x128xf32>
    %31 = arith.addf %29, %30 : vector<4x128xf32>
    %c0_9 = arith.constant 0 : index
    %c0_10 = arith.constant 0 : index
    %32 = vector.load %arg3[%c0_9, %c0_10] : memref<4x128xf32, #tpu.memory_space<vmem>>, vector<4x128xf32>
    tpu.vector_store %arg3[%c0_9, %c0_10], %31 {strides = array<i32>} : memref<4x128xf32, #tpu.memory_space<vmem>>, vector<4x128xf32>,
    %c0_11 = arith.constant 0 : index
    %c0_12 = arith.constant 0 : index
    %33 = vector.load %arg4[%c0_11, %c0_12] : memref<8x128xf32, #tpu.memory_space<vmem>>, vector<8x128xf32>
    tpu.vector_store %arg4[%c0_11, %c0_12], %28 {strides = array<i32>} : memref<8x128xf32, #tpu.memory_space<vmem>>, vector<8x128xf32>,
    return
  }
  func.func @transform_0(%arg0: i32) -> (i32, i32) {
    %c0_i32 = arith.constant 0 : i32
    %c0_i32_0 = arith.constant 0 : i32
    return %c0_i32, %arg0 : i32, i32
  }
  func.func @transform_1(%arg0: i32) -> (i32, i32) {
    %c0_i32 = arith.constant 0 : i32
    %c0_i32_0 = arith.constant 0 : i32
    %c0_i32_1 = arith.constant 0 : i32
    return %c0_i32, %c0_i32_0 : i32, i32
  }
  func.func @transform_2(%arg0: i32) -> (i32, i32) {
    %c0_i32 = arith.constant 0 : i32
    %c0_i32_0 = arith.constant 0 : i32
    return %c0_i32, %arg0 : i32, i32
  }
  func.func @transform_3(%arg0: i32) -> (i32, i32) {
    %c0_i32 = arith.constant 0 : i32
    %c0_i32_0 = arith.constant 0 : i32
    return %c0_i32, %arg0 : i32, i32
  }
}

</mosaic_0001>

<llo_original>
// kernel: tpu_custom_call.1
$region0: #{tpu_custom_call.1}
  #allocation0 [shape = 'u32[]', space=smem, size = 0x4, offset = 0x4, fixed_abs, tag = 'smem constant byte address 0x4 - core index']
  #allocation1 [shape = 'u32[72,128]{1,0:T(1,128)}', space=vmem, size = 0x9000, scoped, tag = 'internal scratch']
  %s0 = inlined_call_operand.vmem [shape: f32[5,128], index: 0, kind: input, shape index: {}]
  %s1 = inlined_call_operand.vmem [shape: f32[28,17], index: 1, kind: input, shape index: {}]
  %s2 = inlined_call_operand.hbm [shape: f32[4,128], index: 2, kind: output, shape index: {0}]
  %s3 = inlined_call_operand.hbm [shape: f32[8,128], index: 3, kind: output, shape index: {1}]
  %4 = xla_tuple %s2, %s3
  %s5 = sld [smem:[#allocation0]]
  $region26: #{tpu_custom_call.1} parent=0
    _
  %s7 = ssub.s32 1, %s5
  %s8 = scalar_select 0, %s7, %s5
  $region1: #{tpu_custom_call.1} parent=0
    #allocation2 [shape = 'u8[2048]{0}', space=vmem, size = 0x800, scoped, tag = 'output window, operand 0, single buffered']
    #allocation3 [shape = 's32[1]{0}', space=sflag, size = 0x4, scoped, tag = 'scoped memory for tpu_custom_call.1']
    #allocation4 [shape = 'u8[4096]{0}', space=vmem, size = 0x1000, scoped, tag = 'output window, operand 1, single buffered']
    #allocation5 [shape = 's32[1]{0}', space=sflag, size = 0x4, scoped, tag = 'scoped memory for tpu_custom_call.1']
    %9 = vsyncpa [#allocation3], 0
    %10 = vsyncpa [#allocation5], 0
    // Predicated region
    $region2: #{tpu_custom_call.1} parent=1 // pred_check
      _
    $region3: #{tpu_custom_call.1} parent=1 // pred_check_branch
      %12 = sbr.rel (0) target = $region5
    $region4: #{tpu_custom_call.1} parent=1 // pred_region
      _
    $region5: #{tpu_custom_call.1} parent=1 // pred_fallthru
      _
    // Predicated region
    $region6: #{tpu_custom_call.1} parent=1 // pred_check
      _
    $region7: #{tpu_custom_call.1} parent=1 // pred_check_branch
      %14 = sbr.rel (0) target = $region9
    $region8: #{tpu_custom_call.1} parent=1 // pred_region
      _
    $region9: #{tpu_custom_call.1} parent=1 // pred_fallthru
      _
    %v15 = vld [vmem:[%s1] sm:$0xff]
    %v16 = vld [vmem:[%s1 + $0x8] sm:$0xff]
    %v17 = vld [vmem:[%s1 + $0x10] sm:$0xff]
    %v18 = vld [vmem:[%s1 + $0x18] sm:$0xf]
    %v19 = vld [vmem:[%s0] sm:$0x1f]
    %21 = vset.pattern.permute.xlu0 5
    %22 = vperm.xlu0 %21, %v15
    %v23 = vpop.permute.xlu0 %22
    %26 = vset.pattern.permute.xlu0 5
    %27 = vperm.xlu0 %26, %v16
    %v28 = vpop.permute.xlu0 %27
    %vm30 = vcmask 39936
    %v31 = vsel %vm30, %v15, 0
    %v33 = vsel %vm30, %v16, 0
    %vm35 = vcmask 1044480
    %v37 = vsel %vm35, %v19, 0
    %39 = vmatpush.msra.mxu0 0.0
    %40 = vmatpush.msra.mxu0 0.0
    %41 = vmatpush.msra.mxu0 0.0
    %42 = vmatpush.msra.mxu0 0.0
    %43 = vmatpush.msra.mxu0 0.0
    %44 = vmatpush.msra.mxu0 0.0
    %45 = vmatpush.msra.mxu0 0.0
    %46 = vmatpush.msra.mxu0 0.0
    %47 = vmatpush.msra.mxu0 0.0
    %48 = vmatpush.msra.mxu0 0.0
    %49 = vmatpush.msra.mxu0 0.0
    %50 = vmatpush.msra.mxu0 0.0
    %51 = vmatpush.msra.mxu0 0.0
    %52 = vmatpush.msra.mxu0 0.0
    %53 = vmatpush.msra.mxu0 0.0
    %54 = vmatpush.msra.mxu0 %v37
    %55 = vmatmul.f32.gmra.mxu0 %v31
    %v56 = vpop.f32.mrf.mxu0
    %v57 = vadd.f32 %v23, %v56
    %58 = vmatmul.f32.gmra.mxu0 %v33
    %v59 = vpop.f32.mrf.mxu0
    %v60 = vadd.f32 %v28, %v59
    %61 = vdwg.mxu0
    %v62 = vmul.f32 %v57, 0.01
    %v63 = vmul.f32 %v60, 0.01
    %v64 = vmax.f32 %v57, %v62
    %v65 = vmax.f32 %v60, %v63
    %67 = vset.pattern.permute.xlu0 16
    %68 = vperm.xlu0 %67, %v17
    %v69 = vpop.permute.xlu0 %68
    %vm71 = vcmask 130048
    %v72 = vsel %vm71, %v17, 0
    %74 = vmatpush.msra.mxu0 0.0
    %75 = vmatpush.msra.mxu0 0.0
    %76 = vmatpush.msra.mxu0 0.0
    %77 = vmatpush.msra.mxu0 0.0
    %78 = vmatpush.msra.mxu0 0.0
    %79 = vmatpush.msra.mxu0 0.0
    %80 = vmatpush.msra.mxu0 0.0
    %81 = vmatpush.msra.mxu0 0.0
    %82 = vmatpush.msra.mxu0 0.0
    %83 = vmatpush.msra.mxu0 0.0
    %84 = vmatpush.msra.mxu0 0.0
    %85 = vmatpush.msra.mxu0 0.0
    %86 = vmatpush.msra.mxu0 0.0
    %87 = vmatpush.msra.mxu0 0.0
    %88 = vmatpush.msra.mxu0 %v65
    %89 = vmatpush.msra.mxu0 %v64
    %90 = vmatmul.f32.gmra.mxu0 %v72
    %v91 = vpop.f32.mrf.mxu0
    %v92 = vadd.f32 %v69, %v91
    %93 = vdwg.mxu0
    %v94 = vmul.f32 %v92, 0.01
    %v95 = vmax.f32 %v92, %v94
    %v96 = vmul.f32 %v95, %v95
    %v97 = vrot.slane %v96, 4
    %v98 = vadd.f32 %v96, %v97
    %v99 = vrot.slane %v98, 2
    %v100 = vadd.f32 %v98, %v99
    %v101 = vrot.slane %v100, 1
    %v102 = vadd.f32 %v100, %v101
    %v103 = vrsqrt.pop %v102
    %v104 = vmul.f32 %v103, %v102
    %v105 = vmul.f32 %v104, %v103
    %v106 = vmul.f32 0.5, %v105
    %v107 = vsub.f32 1.5, %v106
    %v108 = vmul.f32 %v103, %v107
    %v109 = vmul.f32 %v102, %v108
    %vm110 = vcmp.eq.f32.partialorder %v102, inf
    %v111 = vsel %vm110, %v102, %v109
    %vm112 = vcmp.eq.f32.partialorder %v102, 0.0
    %v113 = vand.u32 %v102, 2147483648
    %v114 = vsel %vm112, %v113, %v111
    %v115 = vadd.f32 %v114, 1e-09
    %v116 = vrcp.pop %v115
    %v117 = vmul.f32 %v115, %v116
    %v118 = vsub.f32 1.0, %v117
    %v119 = vmul.f32 %v116, %v118
    %v120 = vadd.f32 %v116, %v119
    %vm121 = vweird.f32 %v115
    %vm122 = vweird.f32 %v116
    %vm123 = vmor %vm121, %vm122
    %v124 = vsel %vm123, %v116, %v120
    %v125 = vand.u32 2147483647, %v115
    %vm126 = vcmp.eq.f32.partialorder %v125, 8.507059e+37
    %v127 = vand.u32 %v115, 2147483648
    %v128 = vor.u32 1.1754944e-38, %v127
    %v129 = vsel %vm126, %v128, %v124
    %v130 = vmul.f32 %v95, %v129
    %132 = vset.pattern.permute.xlu0 8
    %133 = vperm.xlu0 %132, %v18
    %v134 = vpop.permute.xlu0 %133
    %vm136 = vcmask 64512
    %v137 = vsel %vm136, %v18, 0
    %139 = vmatpush.msra.mxu0 0.0
    %140 = vmatpush.msra.mxu0 0.0
    %141 = vmatpush.msra.mxu0 0.0
    %142 = vmatpush.msra.mxu0 0.0
    %143 = vmatpush.msra.mxu0 0.0
    %144 = vmatpush.msra.mxu0 0.0
    %145 = vmatpush.msra.mxu0 0.0
    %146 = vmatpush.msra.mxu0 0.0
    %147 = vmatpush.msra.mxu0 0.0
    %148 = vmatpush.msra.mxu0 0.0
    %149 = vmatpush.msra.mxu0 0.0
    %150 = vmatpush.msra.mxu0 0.0
    %151 = vmatpush.msra.mxu0 0.0
    %152 = vmatpush.msra.mxu0 0.0
    %153 = vmatpush.msra.mxu0 0.0
    %154 = vmatpush.msra.mxu0 %v130
    %155 = vmatmul.f32.gmra.mxu0 %v137
    %v156 = vpop.f32.mrf.mxu0
    %v157 = vadd.f32 %v134, %v156
    %158 = vdwg.mxu0
    %159 = vst [vmem:[#allocation2] sm:$0xf] %v157
    %160 = vst [vmem:[#allocation4] sm:$0xff] %v130
    // Predicated region
    $region10: #{tpu_custom_call.1} parent=1 // pred_check
      _
    $region11: #{tpu_custom_call.1} parent=1 // pred_check_branch
      %162 = sbr.rel (0) target = $region13
    $region12: #{tpu_custom_call.1} parent=1 // pred_region
      %164 = vsyncadd [#allocation3], 0
      %s166 = sshll.u32 [#allocation2], 4
      %s167 = int_to_ptr.vmem [resolvable:$true] %s166
      %s168 = sshll.u32 %s2, 4
      %s169 = int_to_ptr.hbm [resolvable:$true] %s168
      %171 = dma.vmem_to_hbm [thread:$0]  %s167, 64, %s169, [#allocation3]
    $region13: #{tpu_custom_call.1} parent=1 // pred_fallthru
      _
    // Predicated region
    $region14: #{tpu_custom_call.1} parent=1 // pred_check
      _
    $region15: #{tpu_custom_call.1} parent=1 // pred_check_branch
      %173 = sbr.rel (0) target = $region17
    $region16: #{tpu_custom_call.1} parent=1 // pred_region
      %175 = vsyncadd [#allocation5], 0
      %s177 = sshll.u32 [#allocation4], 4
      %s178 = int_to_ptr.vmem [resolvable:$true] %s177
      %s179 = sshll.u32 %s3, 4
      %s180 = int_to_ptr.hbm [resolvable:$true] %s179
      %182 = dma.vmem_to_hbm [thread:$0]  %s178, 128, %s180, [#allocation5]
    $region17: #{tpu_custom_call.1} parent=1 // pred_fallthru
      _
    // Predicated region
    $region18: #{tpu_custom_call.1} parent=1 // pred_check
      _
    $region19: #{tpu_custom_call.1} parent=1 // pred_check_branch
      %184 = sbr.rel (0) target = $region21
    $region20: #{tpu_custom_call.1} parent=1 // pred_region
      %186 = dma.done [#allocation3], 64
    $region21: #{tpu_custom_call.1} parent=1 // pred_fallthru
      _
    // Predicated region
    $region22: #{tpu_custom_call.1} parent=1 // pred_check
      _
    $region23: #{tpu_custom_call.1} parent=1 // pred_check_branch
      %188 = sbr.rel (0) target = $region25
    $region24: #{tpu_custom_call.1} parent=1 // pred_region
      %190 = dma.done [#allocation5], 128
    $region25: #{tpu_custom_call.1} parent=1 // pred_fallthru
      _
    %191 = vsyncpa [#allocation3], 1
    %192 = vsyncpa [#allocation5], 1

</llo_original>
